<compile_context>
chip_gen: v6e
topology: v6e:2x2x1
jax: 0.10.0
libtpu: 0.0.40
codegen_flags: <defaults>
</compile_context>

<pallas_src>
import jax
import jax.numpy as jnp
import numpy as np
from jax.experimental import pallas as pl
from jax.experimental.pallas import tpu as pltpu


def _round_up(x, m):
    return ((x + m - 1) // m) * m


# ----------------------------------------------------------------------------
# Kernel: fused 3-layer MLP for one batch tile.
# ----------------------------------------------------------------------------
def actor_net_kernel(x_ref, w1_ref, b1_ref, w2_ref, b2_ref, w3_ref, b3_ref, out_ref):
    """(Linear -> tanh) x2 -> Linear for one [TILE_B, *] batch tile.

    Weights/biases are whole-array VMEM blocks (constant index_map => resident
    across grid steps). Matmuls may take bf16 inputs but always accumulate in
    f32; bias add + tanh stay in f32 (v5e's VPU/EUP have no bf16 path).
    """
    x = x_ref[...]                                                       # [TB, n_obs_p]
    h1 = jnp.dot(x, w1_ref[...], preferred_element_type=jnp.float32)    # [TB, H_p] f32
    h1 = jnp.tanh(h1 + b1_ref[...])                                     # bias bcast [1, H_p]
    h2 = jnp.dot(h1.astype(w2_ref.dtype), w2_ref[...],
                 preferred_element_type=jnp.float32)                    # [TB, H_p] f32
    h2 = jnp.tanh(h2 + b2_ref[...])
    h3 = jnp.dot(h2.astype(w3_ref.dtype), w3_ref[...],
                 preferred_element_type=jnp.float32)                    # [TB, A_p] f32
    out_ref[...] = (h3 + b3_ref[...]).astype(out_ref.dtype)             # lane-dense store


# ----------------------------------------------------------------------------
# One-time parameter preparation (hoisted out of the forward call).
# ----------------------------------------------------------------------------
def prepare_actor_params(params, *, use_bf16_matmul=True):
    """Pad + cast weights once. Zero-padding is exact here because tanh(0)=0
    and padded rows/cols of the next weight are zero, so padded channels never
    contribute to the real outputs."""
    w1, b1, w2, b2, w3, b3 = params
    n_obs, hidden = w1.shape
    n_actions = w3.shape[1]
    mat_dtype = jnp.bfloat16 if use_bf16_matmul else jnp.float32

    n_obs_p = _round_up(n_obs, 16)        # K axis of layer-1 (covers f32 & bf16 sublanes)
    h_p = _round_up(hidden, 128)          # hidden activations: full lane width
    a_p = _round_up(n_actions, 128)       # lane-dense output slab

    w1p = jnp.pad(w1, ((0, n_obs_p - n_obs), (0, h_p - hidden))).astype(mat_dtype)
    w2p = jnp.pad(w2, ((0, h_p - hidden), (0, h_p - hidden))).astype(mat_dtype)
    w3p = jnp.pad(w3, ((0, h_p - hidden), (0, a_p - n_actions))).astype(mat_dtype)
    # Biases stay f32 (added to the f32 accumulator before tanh).
    b1p = jnp.pad(b1, ((0, 0), (0, h_p - hidden))).astype(jnp.float32)
    b2p = jnp.pad(b2, ((0, 0), (0, h_p - hidden))).astype(jnp.float32)
    b3p = jnp.pad(b3, ((0, 0), (0, a_p - n_actions))).astype(jnp.float32)

    meta = dict(n_obs=n_obs, n_obs_pad=n_obs_p, hidden=hidden, hidden_pad=h_p,
                n_actions=n_actions, a_pad=a_p, mat_dtype=mat_dtype)
    return (w1p, b1p, w2p, b2p, w3p, b3p), meta


def _vmem_capacity_bytes():
    """Best-effort query of per-core VMEM capacity; conservative fallback (v7x)."""
    cap = 64 << 20
    try:
        info = pltpu.get_tpu_info()
        cap = int(getattr(info, "vmem_capacity_bytes", cap))
    except Exception:
        pass
    return cap


# ----------------------------------------------------------------------------
# Forward wrapper: batch-tiled pallas_call over prepared parameters.
# ----------------------------------------------------------------------------
def actor_net_forward(x, prepared, *, max_tile_b=4096):
    """Batch axis is tiled into TILE_B-row blocks (1-D 'parallel' grid);
    weights/biases are VMEM-resident via constant index_maps. Returns
    [batch, n_actions] float32 logits / means."""
    (w1, b1, w2, b2, w3, b3), meta = prepared
    batch, n_obs = x.shape
    assert n_obs == meta["n_obs"], "x feature dim does not match prepared params"

    n_obs_p = meta["n_obs_pad"]
    h_p = meta["hidden_pad"]
    a_p = meta["a_pad"]
    n_actions = meta["n_actions"]
    mat_dtype = meta["mat_dtype"]
    out_dtype = jnp.bfloat16 if mat_dtype == jnp.bfloat16 else jnp.float32

    in_isz = jnp.dtype(mat_dtype).itemsize
    out_isz = jnp.dtype(out_dtype).itemsize

    # ---- tile_b selection: big tiles, capped by a VMEM budget, >=2 steps when possible ----
    vmem_cap = _vmem_capacity_bytes()
    budget = (vmem_cap * 3) // 4                               # leave headroom
    resident_weight_bytes = 2 * sum(                           # (double-buffered by default)
        int(a.size) * a.dtype.itemsize for a in (w1, b1, w2, b2, w3, b3))
    per_row_bytes = 2 * (n_obs_p * in_isz + a_p * out_isz)     # double-buffered x + out tiles
    cap_rows = max(8, ((budget - resident_weight_bytes) // per_row_bytes) // 8 * 8)

    two_step_rows = _round_up(max(1, -(-batch // 2)), 8)       # ceil(batch/2), sublane-aligned
    tile_b = max(8, min(max_tile_b, cap_rows, two_step_rows))

    b_padded = _round_up(batch, tile_b)
    grid = (b_padded // tile_b,)

    # ---- per-call input prep: pad batch/feature axes, cast to matmul dtype ----
    xk = x
    if b_padded != batch or n_obs_p != n_obs:
        xk = jnp.pad(x, ((0, b_padded - batch), (0, n_obs_p - n_obs)))
    xk = xk.astype(mat_dtype)

    cost = pl.CostEstimate(
        flops=2 * b_padded * (n_obs_p * h_p + h_p * h_p + h_p * a_p),
        transcendentals=2 * b_padded * h_p,
        bytes_accessed=(
            b_padded * n_obs_p * in_isz                        # x in
            + b_padded * a_p * out_isz                         # out
            + (n_obs_p * h_p + h_p * h_p + h_p * a_p) * in_isz # weights (once)
            + (2 * h_p + a_p) * 4                              # biases
        ),
    )

    const2d = lambda arr: pl.BlockSpec(arr.shape, lambda i: (0, 0))  # VMEM-resident block

    out = pl.pallas_call(
        actor_net_kernel,
        out_shape=jax.ShapeDtypeStruct((b_padded, a_p), out_dtype),
        grid=grid,
        in_specs=[
            pl.BlockSpec((tile_b, n_obs_p), lambda i: (i, 0)),   # x: batch-tiled
            const2d(w1), const2d(b1),
            const2d(w2), const2d(b2),
            const2d(w3), const2d(b3),
        ],
        out_specs=pl.BlockSpec((tile_b, a_p), lambda i: (i, 0)),
        compiler_params=pltpu.CompilerParams(
            dimension_semantics=("parallel",),
            vmem_limit_bytes=int(budget),
        ),
        cost_estimate=cost,
    )(xk, w1, b1, w2, b2, w3, b3)

    # Slice off batch/action padding; cast the tiny real slice back to f32.
    return out[:batch, :n_actions].astype(jnp.float32)


# ----------------------------------------------------------------------------
# Parameter construction matching the PyTorch module's init.
# ----------------------------------------------------------------------------
def orthogonal_init(key, shape, gain):
    """Deterministic orthogonal init matching nn.init.orthogonal_ semantics."""
    rows, cols = shape
    n = max(rows, cols)
    a = jax.random.normal(key, (n, n), dtype=jnp.float32)
    q, r = jnp.linalg.qr(a)
    d = jnp.diag(r)
    q = q * jnp.where(d == 0, 1.0, jnp.sign(d))  # avoid sign(0)=0 zeroing a column
    return gain * q[:rows, :cols]


def make_actor_params(key, n_observations, num_cells, n_actions):
    k1, k2, k3 = jax.random.split(key, 3)
    # Stored as [in, out] (transposed vs torch's [out, in]).
    w1 = orthogonal_init(k1, (n_observations, num_cells), gain=float(np.sqrt(2)))
    w2 = orthogonal_init(k2, (num_cells, num_cells), gain=float(np.sqrt(2)))
    w3 = orthogonal_init(k3, (num_cells, n_actions), gain=0.01)
    b1 = jnp.zeros((1, num_cells), jnp.float32)
    b2 = jnp.zeros((1, num_cells), jnp.float32)
    b3 = jnp.zeros((1, n_actions), jnp.float32)
    return (w1, b1, w2, b2, w3, b3)


def actor_net_reference(x, params):
    """Pure-JAX reference of the same forward pass (for correctness check)."""
    w1, b1, w2, b2, w3, b3 = params
    a1 = jnp.tanh(x @ w1 + b1)
    a2 = jnp.tanh(a1 @ w2 + b2)
    return a2 @ w3 + b3


if __name__ == "__main__":
    # Small shapes consistent with the module's forward:
    batch = 8
    n_observations = 16
    num_cells = 32
    n_actions = 4

    key = jax.random.PRNGKey(0)
    kx, kp = jax.random.split(key)
    x = jax.random.normal(kx, (batch, n_observations), dtype=jnp.float32)
    params = make_actor_params(kp, n_observations, num_cells, n_actions)
    ref = actor_net_reference(x, params)

    # One-time parameter preparation (hoisted out of the forward path).
    prepared_f32 = prepare_actor_params(params, use_bf16_matmul=False)
    prepared_bf16 = prepare_actor_params(params, use_bf16_matmul=True)

    # f32 path (strict check against the f32 reference).
    out = jax.block_until_ready(actor_net_forward(x, prepared_f32))
    np.testing.assert_allclose(np.asarray(out), np.asarray(ref), rtol=1e-5, atol=1e-5)

    # bf16-matmul + bf16-output path (recommended on v5e/v6e/v7x) — looser tolerance.
    out_bf16 = jax.block_until_ready(actor_net_forward(x, prepared_bf16))
    np.testing.assert_allclose(np.asarray(out_bf16), np.asarray(ref), rtol=2e-2, atol=2e-2)

    # Ragged / multi-tile batch to exercise the batch grid (padding + several steps).
    batch2 = 300
    x2 = jax.random.normal(jax.random.PRNGKey(1), (batch2, n_observations), dtype=jnp.float32)
    out2 = jax.block_until_ready(actor_net_forward(x2, prepared_f32, max_tile_b=64))
    ref2 = actor_net_reference(x2, params)
    np.testing.assert_allclose(np.asarray(out2), np.asarray(ref2), rtol=1e-5, atol=1e-5)

    # Default tile heuristic on the same batch (>=2 grid steps for v7x dual-TC).
    out3 = jax.block_until_ready(actor_net_forward(x2, prepared_bf16))
    np.testing.assert_allclose(np.asarray(out3), np.asarray(ref2), rtol=2e-2, atol=2e-2)

    print("KERNEL_OK")
</pallas_src>

<mosaic_0001>
module attributes {stable_mosaic.version = 11 : i64} {
  func.func @actor_net_kernel(%arg0: i32, %arg1: memref<8x16xf32, #tpu.memory_space<vmem>>, %arg2: memref<16x128xf32, #tpu.memory_space<vmem>>, %arg3: memref<1x128xf32, #tpu.memory_space<vmem>>, %arg4: memref<128x128xf32, #tpu.memory_space<vmem>>, %arg5: memref<1x128xf32, #tpu.memory_space<vmem>>, %arg6: memref<128x128xf32, #tpu.memory_space<vmem>>, %arg7: memref<1x128xf32, #tpu.memory_space<vmem>>, %arg8: memref<8x128xf32, #tpu.memory_space<vmem>>) attributes {dimension_semantics = [#tpu.dimension_semantics<parallel>], iteration_bounds = array<i64: 1>, scalar_prefetch = 0 : i64, scratch_operands = 0 : i64, tpu.core_type = #tpu.core_type<tc>, window_params = [{transform_indices = @transform_0, window_bounds = array<i64: 8, 16>}, {pipeline_mode = #tpu.pipeline_mode<synchronous>, transform_indices = @transform_1, window_bounds = array<i64: 16, 128>}, {pipeline_mode = #tpu.pipeline_mode<synchronous>, transform_indices = @transform_2, window_bounds = array<i64: 1, 128>}, {pipeline_mode = #tpu.pipeline_mode<synchronous>, transform_indices = @transform_3, window_bounds = array<i64: 128, 128>}, {pipeline_mode = #tpu.pipeline_mode<synchronous>, transform_indices = @transform_4, window_bounds = array<i64: 1, 128>}, {pipeline_mode = #tpu.pipeline_mode<synchronous>, transform_indices = @transform_5, window_bounds = array<i64: 128, 128>}, {pipeline_mode = #tpu.pipeline_mode<synchronous>, transform_indices = @transform_6, window_bounds = array<i64: 1, 128>}, {transform_indices = @transform_7, window_bounds = array<i64: 8, 128>}]} {
    %c0 = arith.constant 0 : index
    %c0_0 = arith.constant 0 : index
    %0 = vector.load %arg1[%c0, %c0_0] : memref<8x16xf32, #tpu.memory_space<vmem>>, vector<8x16xf32>
    %c0_1 = arith.constant 0 : index
    %c0_2 = arith.constant 0 : index
    %1 = vector.load %arg2[%c0_1, %c0_2] : memref<16x128xf32, #tpu.memory_space<vmem>>, vector<16x128xf32>
    %cst = arith.constant dense<0.000000e+00> : vector<8x128xf32>
    %2 = tpu.matmul %0, %1, %cst {dimension_numbers = #tpu.dot_dimension_numbers<[1], [0], [0], [1], [0, 0, 1, 1], [], []>} : vector<8x16xf32>, vector<16x128xf32>, vector<8x128xf32> -> vector<8x128xf32>
    %c0_3 = arith.constant 0 : index
    %c0_4 = arith.constant 0 : index
    %3 = vector.load %arg3[%c0_3, %c0_4] : memref<1x128xf32, #tpu.memory_space<vmem>>, vector<1x128xf32>
    %4 = vector.broadcast %3 : vector<1x128xf32> to vector<8x128xf32>
    %5 = arith.addf %2, %4 : vector<8x128xf32>
    %6 = math.tanh %5 : vector<8x128xf32>
    %c0_5 = arith.constant 0 : index
    %c0_6 = arith.constant 0 : index
    %7 = vector.load %arg4[%c0_5, %c0_6] : memref<128x128xf32, #tpu.memory_space<vmem>>, vector<128x128xf32>
    %cst_7 = arith.constant dense<0.000000e+00> : vector<8x128xf32>
    %8 = tpu.matmul %6, %7, %cst_7 {dimension_numbers = #tpu.dot_dimension_numbers<[1], [0], [0], [1], [0, 0, 1, 1], [], []>} : vector<8x128xf32>, vector<128x128xf32>, vector<8x128xf32> -> vector<8x128xf32>
    %c0_8 = arith.constant 0 : index
    %c0_9 = arith.constant 0 : index
    %9 = vector.load %arg5[%c0_8, %c0_9] : memref<1x128xf32, #tpu.memory_space<vmem>>, vector<1x128xf32>
    %10 = vector.broadcast %9 : vector<1x128xf32> to vector<8x128xf32>
    %11 = arith.addf %8, %10 : vector<8x128xf32>
    %12 = math.tanh %11 : vector<8x128xf32>
    %c0_10 = arith.constant 0 : index
    %c0_11 = arith.constant 0 : index
    %13 = vector.load %arg6[%c0_10, %c0_11] : memref<128x128xf32, #tpu.memory_space<vmem>>, vector<128x128xf32>
    %cst_12 = arith.constant dense<0.000000e+00> : vector<8x128xf32>
    %14 = tpu.matmul %12, %13, %cst_12 {dimension_numbers = #tpu.dot_dimension_numbers<[1], [0], [0], [1], [0, 0, 1, 1], [], []>} : vector<8x128xf32>, vector<128x128xf32>, vector<8x128xf32> -> vector<8x128xf32>
    %c0_13 = arith.constant 0 : index
    %c0_14 = arith.constant 0 : index
    %15 = vector.load %arg7[%c0_13, %c0_14] : memref<1x128xf32, #tpu.memory_space<vmem>>, vector<1x128xf32>
    %16 = vector.broadcast %15 : vector<1x128xf32> to vector<8x128xf32>
    %17 = arith.addf %14, %16 : vector<8x128xf32>
    %c0_15 = arith.constant 0 : index
    %c0_16 = arith.constant 0 : index
    %18 = vector.load %arg8[%c0_15, %c0_16] : memref<8x128xf32, #tpu.memory_space<vmem>>, vector<8x128xf32>
    tpu.vector_store %arg8[%c0_15, %c0_16], %17 {strides = array<i32>} : memref<8x128xf32, #tpu.memory_space<vmem>>, vector<8x128xf32>,
    return
  }
  func.func @transform_0(%arg0: i32) -> (i32, i32) {
    %c0_i32 = arith.constant 0 : i32
    %c0_i32_0 = arith.constant 0 : i32
    return %arg0, %c0_i32 : i32, i32
  }
  func.func @transform_1(%arg0: i32) -> (i32, i32) {
    %c0_i32 = arith.constant 0 : i32
    %c0_i32_0 = arith.constant 0 : i32
    %c0_i32_1 = arith.constant 0 : i32
    return %c0_i32, %c0_i32_0 : i32, i32
  }
  func.func @transform_2(%arg0: i32) -> (i32, i32) {
    %c0_i32 = arith.constant 0 : i32
    %c0_i32_0 = arith.constant 0 : i32
    %c0_i32_1 = arith.constant 0 : i32
    return %c0_i32, %c0_i32_0 : i32, i32
  }
  func.func @transform_3(%arg0: i32) -> (i32, i32) {
    %c0_i32 = arith.constant 0 : i32
    %c0_i32_0 = arith.constant 0 : i32
    %c0_i32_1 = arith.constant 0 : i32
    return %c0_i32, %c0_i32_0 : i32, i32
  }
  func.func @transform_4(%arg0: i32) -> (i32, i32) {
    %c0_i32 = arith.constant 0 : i32
    %c0_i32_0 = arith.constant 0 : i32
    %c0_i32_1 = arith.constant 0 : i32
    return %c0_i32, %c0_i32_0 : i32, i32
  }
  func.func @transform_5(%arg0: i32) -> (i32, i32) {
    %c0_i32 = arith.constant 0 : i32
    %c0_i32_0 = arith.constant 0 : i32
    %c0_i32_1 = arith.constant 0 : i32
    return %c0_i32, %c0_i32_0 : i32, i32
  }
  func.func @transform_6(%arg0: i32) -> (i32, i32) {
    %c0_i32 = arith.constant 0 : i32
    %c0_i32_0 = arith.constant 0 : i32
    %c0_i32_1 = arith.constant 0 : i32
    return %c0_i32, %c0_i32_0 : i32, i32
  }
  func.func @transform_7(%arg0: i32) -> (i32, i32) {
    %c0_i32 = arith.constant 0 : i32
    %c0_i32_0 = arith.constant 0 : i32
    return %arg0, %c0_i32 : i32, i32
  }
}

</mosaic_0001>

<llo_original>
// kernel: tpu_custom_call.1
$region0: #{tpu_custom_call.1}
  #allocation0 [shape = 'u32[]', space=smem, size = 0x4, offset = 0x4, fixed_abs, tag = 'smem constant byte address 0x4 - core index']
  #allocation1 [shape = 'u32[144,128]{1,0:T(1,128)}', space=vmem, size = 0x12000, scoped, tag = 'internal scratch']
  %s0 = inlined_call_operand.hbm [shape: f32[8,16], index: 0, kind: input, shape index: {}]
  %s1 = inlined_call_operand.hbm [shape: f32[16,128], index: 1, kind: input, shape index: {}]
  %s2 = inlined_call_operand.vmem [shape: f32[1,128], index: 2, kind: input, shape index: {}]
  %s3 = inlined_call_operand.hbm [shape: f32[128,128], index: 3, kind: input, shape index: {}]
  %s4 = inlined_call_operand.vmem [shape: f32[1,128], index: 4, kind: input, shape index: {}]
  %s5 = inlined_call_operand.hbm [shape: f32[128,128], index: 5, kind: input, shape index: {}]
  %s6 = inlined_call_operand.vmem [shape: f32[1,128], index: 6, kind: input, shape index: {}]
  %s7 = inlined_call_operand.hbm [shape: f32[8,128], index: 7, kind: output, shape index: {}]
  %s8 = sld [smem:[#allocation0]]
  $region54: #{tpu_custom_call.1} parent=0
    _
  %s10 = ssub.s32 1, %s8
  %s11 = scalar_select 0, %s10, %s8
  $region1: #{tpu_custom_call.1} parent=0
    #allocation2 [shape = 'u8[4096]{0}', space=vmem, size = 0x1000, scoped, tag = 'input window, operand 0, single buffered']
    #allocation3 [shape = 's32[1]{0}', space=sflag, size = 0x4, scoped, tag = 'scoped memory for tpu_custom_call.1']
    #allocation4 [shape = 's32[1]{0}', space=sflag, size = 0x4, scoped, tag = 'scoped memory for tpu_custom_call.1']
    #allocation5 [shape = 'u8[8192]{0}', space=vmem, size = 0x2000, scoped, tag = 'input window, operand 1, single buffered']
    #allocation6 [shape = 's32[1]{0}', space=sflag, size = 0x4, scoped, tag = 'scoped memory for tpu_custom_call.1']
    #allocation7 [shape = 'u8[65536]{0}', space=vmem, size = 0x10000, scoped, tag = 'input window, operand 3, single buffered']
    #allocation8 [shape = 'u8[65536]{0}', space=vmem, size = 0x10000, scoped, tag = 'input window, operand 5, single buffered']
    #allocation9 [shape = 's32[1]{0}', space=sflag, size = 0x4, scoped, tag = 'scoped memory for tpu_custom_call.1']
    #allocation10 [shape = 'u8[4096]{0}', space=vmem, size = 0x1000, scoped, tag = 'output window, operand 0, single buffered']
    %12 = vsyncpa [#allocation3], 0
    %13 = vsyncpa [#allocation6], 0
    %14 = vsyncpa [#allocation9], 0
    %15 = vsyncpa [#allocation4], 0
    // Predicated region
    $region2: #{tpu_custom_call.1} parent=1 // pred_check
      _
    $region3: #{tpu_custom_call.1} parent=1 // pred_check_branch
      %17 = sbr.rel (0) target = $region5
    $region4: #{tpu_custom_call.1} parent=1 // pred_region
      %s19 = ssub.s32 128, 128
      %20 = vsyncadd [#allocation3], %s19
      %s22 = sshll.u32 [#allocation2], 4
      %s23 = int_to_ptr.vmem [resolvable:$true] %s22
      %25 = dma.hbm_to_vmem [thread:$0]  %s0, 128, %s23, [#allocation3]
    $region5: #{tpu_custom_call.1} parent=1 // pred_fallthru
      _
    // Predicated region
    $region6: #{tpu_custom_call.1} parent=1 // pred_check
      _
    $region7: #{tpu_custom_call.1} parent=1 // pred_check_branch
      %27 = sbr.rel (0) target = $region9
    $region8: #{tpu_custom_call.1} parent=1 // pred_region
      %s29 = ssub.s32 256, 256
      %30 = vsyncadd [#allocation6], %s29
      %s31 = sshll.u32 [#allocation5], 4
      %s32 = int_to_ptr.vmem [resolvable:$true] %s31
      %37 = dma.hbm_to_vmem [thread:$0]  %s1, 256, %s32, [#allocation6], 128, 128, 8
    $region9: #{tpu_custom_call.1} parent=1 // pred_fallthru
      _
    // Predicated region
    $region10: #{tpu_custom_call.1} parent=1 // pred_check
      _
    $region11: #{tpu_custom_call.1} parent=1 // pred_check_branch
      %39 = sbr.rel (0) target = $region13
    $region12: #{tpu_custom_call.1} parent=1 // pred_region
      _
    $region13: #{tpu_custom_call.1} parent=1 // pred_fallthru
      _
    // Predicated region
    $region14: #{tpu_custom_call.1} parent=1 // pred_check
      _
    $region15: #{tpu_custom_call.1} parent=1 // pred_check_branch
      %41 = sbr.rel (0) target = $region17
    $region16: #{tpu_custom_call.1} parent=1 // pred_region
      %s43 = ssub.s32 2048, 2048
      %44 = vsyncadd [#allocation6], %s43
      %s45 = sshll.u32 [#allocation7], 4
      %s46 = int_to_ptr.vmem [resolvable:$true] %s45
      %51 = dma.hbm_to_vmem [thread:$0]  %s3, 2048, %s46, [#allocation6], 128, 128, 8
    $region17: #{tpu_custom_call.1} parent=1 // pred_fallthru
      _
    // Predicated region
    $region18: #{tpu_custom_call.1} parent=1 // pred_check
      _
    $region19: #{tpu_custom_call.1} parent=1 // pred_check_branch
      %53 = sbr.rel (0) target = $region21
    $region20: #{tpu_custom_call.1} parent=1 // pred_region
      _
    $region21: #{tpu_custom_call.1} parent=1 // pred_fallthru
      _
    // Predicated region
    $region22: #{tpu_custom_call.1} parent=1 // pred_check
      _
    $region23: #{tpu_custom_call.1} parent=1 // pred_check_branch
      %55 = sbr.rel (0) target = $region25
    $region24: #{tpu_custom_call.1} parent=1 // pred_region
      %s57 = ssub.s32 2048, 2048
      %58 = vsyncadd [#allocation9], %s57
      %s59 = sshll.u32 [#allocation8], 4
      %s60 = int_to_ptr.vmem [resolvable:$true] %s59
      %65 = dma.hbm_to_vmem [thread:$0]  %s5, 2048, %s60, [#allocation9], 128, 128, 8
    $region25: #{tpu_custom_call.1} parent=1 // pred_fallthru
      _
    // Predicated region
    $region26: #{tpu_custom_call.1} parent=1 // pred_check
      _
    $region27: #{tpu_custom_call.1} parent=1 // pred_check_branch
      %67 = sbr.rel (0) target = $region29
    $region28: #{tpu_custom_call.1} parent=1 // pred_region
      _
    $region29: #{tpu_custom_call.1} parent=1 // pred_fallthru
      _
    // Predicated region
    $region30: #{tpu_custom_call.1} parent=1 // pred_check
      _
    $region31: #{tpu_custom_call.1} parent=1 // pred_check_branch
      %69 = sbr.rel (0) target = $region33
    $region32: #{tpu_custom_call.1} parent=1 // pred_region
      %70 = dma.done [#allocation3], 128
    $region33: #{tpu_custom_call.1} parent=1 // pred_fallthru
      _
    // Predicated region
    $region34: #{tpu_custom_call.1} parent=1 // pred_check
      _
    $region35: #{tpu_custom_call.1} parent=1 // pred_check_branch
      %72 = sbr.rel (0) target = $region37
    $region36: #{tpu_custom_call.1} parent=1 // pred_region
      %73 = dma.done [#allocation6], 256
    $region37: #{tpu_custom_call.1} parent=1 // pred_fallthru
      _
    // Predicated region
    $region38: #{tpu_custom_call.1} parent=1 // pred_check
      _
    $region39: #{tpu_custom_call.1} parent=1 // pred_check_branch
      %75 = sbr.rel (0) target = $region41
    $region40: #{tpu_custom_call.1} parent=1 // pred_region
      %76 = dma.done [#allocation6], 2048
    $region41: #{tpu_custom_call.1} parent=1 // pred_fallthru
      _
    // Predicated region
    $region42: #{tpu_custom_call.1} parent=1 // pred_check
      _
    $region43: #{tpu_custom_call.1} parent=1 // pred_check_branch
      %78 = sbr.rel (0) target = $region45
    $region44: #{tpu_custom_call.1} parent=1 // pred_region
      %79 = dma.done [#allocation9], 2048
    $region45: #{tpu_custom_call.1} parent=1 // pred_fallthru
      _
    %v80 = vld [vmem:[#allocation2] sm:$0xff]
    %v81 = vld [vmem:[#allocation5] sm:$0xff]
    %v82 = vld [vmem:[#allocation5 + $0x8] sm:$0xff]
    %v83 = vld [vmem:[%s2] sm:$0x1]
    %v85 = vlaneseq
    %v86 = vshrl.u32 %v85, 7
    %v87 = vsub.s32 0, %v86
    %v88 = vrot.slane %v83, %v87
    %vm90 = vcmask 130048
    %v92 = vsel %vm90, %v80, 0
    %94 = vmatprep.subr.mxu0 0.0
    %95 = vmatpush1.msra.mxu0 0.0
    %96 = vmatprep.subr.mxu0 0.0
    %97 = vmatpush1.msra.mxu0 0.0
    %98 = vmatprep.subr.mxu0 0.0
    %99 = vmatpush1.msra.mxu0 0.0
    %100 = vmatprep.subr.mxu0 0.0
    %101 = vmatpush1.msra.mxu0 0.0
    %102 = vmatprep.subr.mxu0 0.0
    %103 = vmatpush1.msra.mxu0 0.0
    %104 = vmatprep.subr.mxu0 0.0
    %105 = vmatpush1.msra.mxu0 0.0
    %106 = vmatprep.subr.mxu0 0.0
    %107 = vmatpush1.msra.mxu0 0.0
    %108 = vmatprep.subr.mxu0 0.0
    %109 = vmatpush1.msra.mxu0 0.0
    %110 = vmatprep.subr.mxu0 0.0
    %111 = vmatpush1.msra.mxu0 0.0
    %112 = vmatprep.subr.mxu0 0.0
    %113 = vmatpush1.msra.mxu0 0.0
    %114 = vmatprep.subr.mxu0 0.0
    %115 = vmatpush1.msra.mxu0 0.0
    %116 = vmatprep.subr.mxu0 0.0
    %117 = vmatpush1.msra.mxu0 0.0
    %118 = vmatprep.subr.mxu0 0.0
    %119 = vmatpush1.msra.mxu0 0.0
    %120 = vmatprep.subr.mxu0 0.0
    %121 = vmatpush1.msra.mxu0 0.0
    %122 = vmatprep.subr.mxu0 0.0
    %123 = vmatpush1.msra.mxu0 %v82
    %124 = vmatprep.subr.mxu0 0.0
    %125 = vmatpush1.msra.mxu0 %v81
    %126 = vmatprep.subr.mxu0 0.0
    %127 = vmatpush2.msra.mxu0 0.0
    %128 = vmatprep.subr.mxu0 0.0
    %129 = vmatpush2.msra.mxu0 0.0
    %130 = vmatprep.subr.mxu0 0.0
    %131 = vmatpush2.msra.mxu0 0.0
    %132 = vmatprep.subr.mxu0 0.0
    %133 = vmatpush2.msra.mxu0 0.0
    %134 = vmatprep.subr.mxu0 0.0
    %135 = vmatpush2.msra.mxu0 0.0
    %136 = vmatprep.subr.mxu0 0.0
    %137 = vmatpush2.msra.mxu0 0.0
    %138 = vmatprep.subr.mxu0 0.0
    %139 = vmatpush2.msra.mxu0 0.0
    %140 = vmatprep.subr.mxu0 0.0
    %141 = vmatpush2.msra.mxu0 0.0
    %142 = vmatprep.subr.mxu0 0.0
    %143 = vmatpush2.msra.mxu0 0.0
    %144 = vmatprep.subr.mxu0 0.0
    %145 = vmatpush2.msra.mxu0 0.0
    %146 = vmatprep.subr.mxu0 0.0
    %147 = vmatpush2.msra.mxu0 0.0
    %148 = vmatprep.subr.mxu0 0.0
    %149 = vmatpush2.msra.mxu0 0.0
    %150 = vmatprep.subr.mxu0 0.0
    %151 = vmatpush2.msra.mxu0 0.0
    %152 = vmatprep.subr.mxu0 0.0
    %153 = vmatpush2.msra.mxu0 0.0
    %154 = vmatprep.subr.mxu0 0.0
    %155 = vmatpush2.msra.mxu0 0.0
    %156 = vmatprep.subr.mxu0 0.0
    %157 = vmatpush2.msra.mxu0 0.0
    %158 = vmatprep.mubr.f32.mxu0 0.0
    %159 = vmatmul.mubr.f32.gmra.mxu0 %v92
    %v160 = vpop.f32.mrf.mxu0
    %v161 = vadd.f32 %v88, %v160
    %v162 = vpop.f32.mrf.mxu0
    %163 = vdwg.mxu0
    %v164 = vtanh.pop %v161
    %v165 = vld [vmem:[#allocation7] sm:$0xff]
    %v166 = vld [vmem:[#allocation7 + $0x8] sm:$0xff]
    %v167 = vld [vmem:[#allocation7 + $0x10] sm:$0xff]
    %v168 = vld [vmem:[#allocation7 + $0x18] sm:$0xff]
    %v169 = vld [vmem:[#allocation7 + $0x20] sm:$0xff]
    %v170 = vld [vmem:[#allocation7 + $0x28] sm:$0xff]
    %v171 = vld [vmem:[#allocation7 + $0x30] sm:$0xff]
    %v172 = vld [vmem:[#allocation7 + $0x38] sm:$0xff]
    %v173 = vld [vmem:[#allocation7 + $0x40] sm:$0xff]
    %v174 = vld [vmem:[#allocation7 + $0x48] sm:$0xff]
    %v175 = vld [vmem:[#allocation7 + $0x50] sm:$0xff]
    %v176 = vld [vmem:[#allocation7 + $0x58] sm:$0xff]
    %v177 = vld [vmem:[#allocation7 + $0x60] sm:$0xff]
    %v178 = vld [vmem:[#allocation7 + $0x68] sm:$0xff]
    %v179 = vld [vmem:[#allocation7 + $0x70] sm:$0xff]
    %v180 = vld [vmem:[#allocation7 + $0x78] sm:$0xff]
    %v181 = vld [vmem:[%s4] sm:$0x1]
    %v183 = vlaneseq
    %v184 = vshrl.u32 %v183, 7
    %v185 = vsub.s32 0, %v184
    %v186 = vrot.slane %v181, %v185
    %188 = vmatprep.subr.mxu0 0.0
    %189 = vmatpush1.msra.mxu0 %v180
    %190 = vmatprep.subr.mxu0 0.0
    %191 = vmatpush1.msra.mxu0 %v179
    %192 = vmatprep.subr.mxu0 0.0
    %193 = vmatpush1.msra.mxu0 %v178
    %194 = vmatprep.subr.mxu0 0.0
    %195 = vmatpush1.msra.mxu0 %v177
    %196 = vmatprep.subr.mxu0 0.0
    %197 = vmatpush1.msra.mxu0 %v176
    %198 = vmatprep.subr.mxu0 0.0
    %199 = vmatpush1.msra.mxu0 %v175
    %200 = vmatprep.subr.mxu0 0.0
    %201 = vmatpush1.msra.mxu0 %v174
    %202 = vmatprep.subr.mxu0 0.0
    %203 = vmatpush1.msra.mxu0 %v173
    %204 = vmatprep.subr.mxu0 0.0
    %205 = vmatpush1.msra.mxu0 %v172
    %206 = vmatprep.subr.mxu0 0.0
    %207 = vmatpush1.msra.mxu0 %v171
    %208 = vmatprep.subr.mxu0 0.0
    %209 = vmatpush1.msra.mxu0 %v170
    %210 = vmatprep.subr.mxu0 0.0
    %211 = vmatpush1.msra.mxu0 %v169
    %212 = vmatprep.subr.mxu0 0.0
    %213 = vmatpush1.msra.mxu0 %v168
    %214 = vmatprep.subr.mxu0 0.0
    %215 = vmatpush1.msra.mxu0 %v167
    %216 = vmatprep.subr.mxu0 0.0
    %217 = vmatpush1.msra.mxu0 %v166
    %218 = vmatprep.subr.mxu0 0.0
    %219 = vmatpush1.msra.mxu0 %v165
    %220 = vmatprep.subr.mxu0 0.0
    %221 = vmatpush2.msra.mxu0 0.0
    %222 = vmatprep.subr.mxu0 0.0
    %223 = vmatpush2.msra.mxu0 0.0
    %224 = vmatprep.subr.mxu0 0.0
    %225 = vmatpush2.msra.mxu0 0.0
    %226 = vmatprep.subr.mxu0 0.0
    %227 = vmatpush2.msra.mxu0 0.0
    %228 = vmatprep.subr.mxu0 0.0
    %229 = vmatpush2.msra.mxu0 0.0
    %230 = vmatprep.subr.mxu0 0.0
    %231 = vmatpush2.msra.mxu0 0.0
    %232 = vmatprep.subr.mxu0 0.0
    %233 = vmatpush2.msra.mxu0 0.0
    %234 = vmatprep.subr.mxu0 0.0
    %235 = vmatpush2.msra.mxu0 0.0
    %236 = vmatprep.subr.mxu0 0.0
    %237 = vmatpush2.msra.mxu0 0.0
    %238 = vmatprep.subr.mxu0 0.0
    %239 = vmatpush2.msra.mxu0 0.0
    %240 = vmatprep.subr.mxu0 0.0
    %241 = vmatpush2.msra.mxu0 0.0
    %242 = vmatprep.subr.mxu0 0.0
    %243 = vmatpush2.msra.mxu0 0.0
    %244 = vmatprep.subr.mxu0 0.0
    %245 = vmatpush2.msra.mxu0 0.0
    %246 = vmatprep.subr.mxu0 0.0
    %247 = vmatpush2.msra.mxu0 0.0
    %248 = vmatprep.subr.mxu0 0.0
    %249 = vmatpush2.msra.mxu0 0.0
    %250 = vmatprep.subr.mxu0 0.0
    %251 = vmatpush2.msra.mxu0 0.0
    %252 = vmatprep.mubr.f32.mxu0 0.0
    %253 = vmatmul.mubr.f32.gmra.mxu0 %v164
    %v254 = vpop.f32.mrf.mxu0
    %v255 = vadd.f32 %v186, %v254
    %v256 = vpop.f32.mrf.mxu0
    %257 = vdwg.mxu0
    %v258 = vtanh.pop %v255
    %v259 = vld [vmem:[#allocation8] sm:$0xff]
    %v260 = vld [vmem:[#allocation8 + $0x8] sm:$0xff]
    %v261 = vld [vmem:[#allocation8 + $0x10] sm:$0xff]
    %v262 = vld [vmem:[#allocation8 + $0x18] sm:$0xff]
    %v263 = vld [vmem:[#allocation8 + $0x20] sm:$0xff]
    %v264 = vld [vmem:[#allocation8 + $0x28] sm:$0xff]
    %v265 = vld [vmem:[#allocation8 + $0x30] sm:$0xff]
    %v266 = vld [vmem:[#allocation8 + $0x38] sm:$0xff]
    %v267 = vld [vmem:[#allocation8 + $0x40] sm:$0xff]
    %v268 = vld [vmem:[#allocation8 + $0x48] sm:$0xff]
    %v269 = vld [vmem:[#allocation8 + $0x50] sm:$0xff]
    %v270 = vld [vmem:[#allocation8 + $0x58] sm:$0xff]
    %v271 = vld [vmem:[#allocation8 + $0x60] sm:$0xff]
    %v272 = vld [vmem:[#allocation8 + $0x68] sm:$0xff]
    %v273 = vld [vmem:[#allocation8 + $0x70] sm:$0xff]
    %v274 = vld [vmem:[#allocation8 + $0x78] sm:$0xff]
    %v275 = vld [vmem:[%s6] sm:$0x1]
    %v277 = vlaneseq
    %v278 = vshrl.u32 %v277, 7
    %v279 = vsub.s32 0, %v278
    %v280 = vrot.slane %v275, %v279
    %282 = vmatprep.subr.mxu0 0.0
    %283 = vmatpush1.msra.mxu0 %v274
    %284 = vmatprep.subr.mxu0 0.0
    %285 = vmatpush1.msra.mxu0 %v273
    %286 = vmatprep.subr.mxu0 0.0
    %287 = vmatpush1.msra.mxu0 %v272
    %288 = vmatprep.subr.mxu0 0.0
    %289 = vmatpush1.msra.mxu0 %v271
    %290 = vmatprep.subr.mxu0 0.0
    %291 = vmatpush1.msra.mxu0 %v270
    %292 = vmatprep.subr.mxu0 0.0
    %293 = vmatpush1.msra.mxu0 %v269
    %294 = vmatprep.subr.mxu0 0.0
    %295 = vmatpush1.msra.mxu0 %v268
    %296 = vmatprep.subr.mxu0 0.0
    %297 = vmatpush1.msra.mxu0 %v267
    %298 = vmatprep.subr.mxu0 0.0
    %299 = vmatpush1.msra.mxu0 %v266
    %300 = vmatprep.subr.mxu0 0.0
    %301 = vmatpush1.msra.mxu0 %v265
    %302 = vmatprep.subr.mxu0 0.0
    %303 = vmatpush1.msra.mxu0 %v264
    %304 = vmatprep.subr.mxu0 0.0
    %305 = vmatpush1.msra.mxu0 %v263
    %306 = vmatprep.subr.mxu0 0.0
    %307 = vmatpush1.msra.mxu0 %v262
    %308 = vmatprep.subr.mxu0 0.0
    %309 = vmatpush1.msra.mxu0 %v261
    %310 = vmatprep.subr.mxu0 0.0
    %311 = vmatpush1.msra.mxu0 %v260
    %312 = vmatprep.subr.mxu0 0.0
    %313 = vmatpush1.msra.mxu0 %v259
    %314 = vmatprep.subr.mxu0 0.0
    %315 = vmatpush2.msra.mxu0 0.0
    %316 = vmatprep.subr.mxu0 0.0
    %317 = vmatpush2.msra.mxu0 0.0
    %318 = vmatprep.subr.mxu0 0.0
    %319 = vmatpush2.msra.mxu0 0.0
    %320 = vmatprep.subr.mxu0 0.0
    %321 = vmatpush2.msra.mxu0 0.0
    %322 = vmatprep.subr.mxu0 0.0
    %323 = vmatpush2.msra.mxu0 0.0
    %324 = vmatprep.subr.mxu0 0.0
    %325 = vmatpush2.msra.mxu0 0.0
    %326 = vmatprep.subr.mxu0 0.0
    %327 = vmatpush2.msra.mxu0 0.0
    %328 = vmatprep.subr.mxu0 0.0
    %329 = vmatpush2.msra.mxu0 0.0
    %330 = vmatprep.subr.mxu0 0.0
    %331 = vmatpush2.msra.mxu0 0.0
    %332 = vmatprep.subr.mxu0 0.0
    %333 = vmatpush2.msra.mxu0 0.0
    %334 = vmatprep.subr.mxu0 0.0
    %335 = vmatpush2.msra.mxu0 0.0
    %336 = vmatprep.subr.mxu0 0.0
    %337 = vmatpush2.msra.mxu0 0.0
    %338 = vmatprep.subr.mxu0 0.0
    %339 = vmatpush2.msra.mxu0 0.0
    %340 = vmatprep.subr.mxu0 0.0
    %341 = vmatpush2.msra.mxu0 0.0
    %342 = vmatprep.subr.mxu0 0.0
    %343 = vmatpush2.msra.mxu0 0.0
    %344 = vmatprep.subr.mxu0 0.0
    %345 = vmatpush2.msra.mxu0 0.0
    %346 = vmatprep.mubr.f32.mxu0 0.0
    %347 = vmatmul.mubr.f32.gmra.mxu0 %v258
    %v348 = vpop.f32.mrf.mxu0
    %v349 = vadd.f32 %v280, %v348
    %v350 = vpop.f32.mrf.mxu0
    %351 = vdwg.mxu0
    %352 = vst [vmem:[#allocation10] sm:$0xff] %v349
    // Predicated region
    $region46: #{tpu_custom_call.1} parent=1 // pred_check
      _
    $region47: #{tpu_custom_call.1} parent=1 // pred_check_branch
      %354 = sbr.rel (0) target = $region49
    $region48: #{tpu_custom_call.1} parent=1 // pred_region
      %s356 = ssub.s32 128, 128
      %357 = vsyncadd [#allocation4], %s356
      %s359 = sshll.u32 [#allocation10], 4
      %s360 = int_to_ptr.vmem [resolvable:$true] %s359
      %362 = dma.vmem_to_hbm [thread:$0]  %s360, 128, %s7, [#allocation4]
    $region49: #{tpu_custom_call.1} parent=1 // pred_fallthru
      _
    // Predicated region
    $region50: #{tpu_custom_call.1} parent=1 // pred_check
      _
    $region51: #{tpu_custom_call.1} parent=1 // pred_check_branch
      %364 = sbr.rel (0) target = $region53
    $region52: #{tpu_custom_call.1} parent=1 // pred_region
      %365 = dma.done [#allocation4], 128
    $region53: #{tpu_custom_call.1} parent=1 // pred_fallthru
      _
    %366 = vsyncpa [#allocation3], 1
    %367 = vsyncpa [#allocation6], 1
    %368 = vsyncpa [#allocation9], 1
    %369 = vsyncpa [#allocation4], 1

</llo_original>
